<compile_context>
chip_gen: v7x
topology: tpu7x:2x2x1
jax: 0.10.0
libtpu: 0.0.40
codegen_flags: <defaults>
</compile_context>

<pallas_src>
import functools

import jax
import jax.numpy as jnp
from jax import lax
from jax.experimental import pallas as pl
from jax.experimental.pallas import tpu as pltpu


def _sublane_unit(dtype):
    """Sublane granularity of the (sublane, 128) tiling for this dtype."""
    itemsize = jnp.dtype(dtype).itemsize          # 4 (f32), 2 (bf16), 1 (i8/fp8)
    return max(8, (4 // itemsize) * 8)            # 8 / 16 / 32


def _pick_tile(dim, unit, cap):
    """Largest multiple of `unit` dividing `dim`, capped at `cap`; else full dim."""
    if dim <= cap:
        return dim
    t = (cap // unit) * unit
    while t >= unit:
        if dim % t == 0:
            return t
        t -= unit
    return dim


def _generation_budgets():
    """Returns (vmem_limit_bytes, streaming_tile_budget_bytes, lane_tile_cap)."""
    vmem_phys = 64 * 1024 * 1024                  # conservative default (v7x-like)
    try:
        info = pltpu.get_tpu_info()
        for attr in ("vmem_capacity_bytes", "vmem_size_bytes", "vmem_bytes"):
            v = getattr(info, attr, None)
            if v:
                vmem_phys = int(v)
                break
    except Exception:
        pass
    if vmem_phys >= 96 * 1024 * 1024:             # v5e / v6e: 128 MiB physical VMEM
        return 64 * 1024 * 1024, 4 * 1024 * 1024, 4096
    return 32 * 1024 * 1024, 2 * 1024 * 1024, 2048  # v7x (64 MiB) or unknown


def _bn_fused_kernel(x_ref, gamma_ref, beta_ref, rm_ref, rv_ref,
                     y_ref, new_rm_ref, new_rv_ref, *, momentum, eps, m_total):
    """Fused single-read path: one channel-group slab (N, TC, HW) resident in VMEM.

    Exact two-pass statistics (mean, then centered variance) followed by the
    normalization, all on the VMEM-resident slab -> x is read from HBM once.
    """
    x = x_ref[...].astype(jnp.float32)                         # (N, TC, HW)
    inv_m = 1.0 / m_total
    # N-axis reduce = pure VPU vreg adds; single lane reduce per pass = XLU.
    mean = jnp.sum(jnp.sum(x, axis=0), axis=-1, keepdims=True) * inv_m     # (TC,1)
    xc = x - mean[None]
    var_b = jnp.sum(jnp.sum(xc * xc, axis=0), axis=-1, keepdims=True) * inv_m
    scale = gamma_ref[...] * lax.rsqrt(var_b + eps)            # (TC,1)
    y_ref[...] = (xc * scale[None] + beta_ref[...][None]).astype(y_ref.dtype)
    # PyTorch updates running variance with the *unbiased* batch variance.
    bessel = m_total / max(m_total - 1.0, 1.0)
    new_rm_ref[...] = (1.0 - momentum) * rm_ref[...] + momentum * mean
    new_rv_ref[...] = (1.0 - momentum) * rv_ref[...] + momentum * (var_b * bessel)


def _bn_partial_kernel(x_ref, rm_ref, psum_ref, pssq_ref):
    """Streaming pass 1: lane-wide (TC,128) partial shifted sums / sums of squares.

    The output blocks themselves are the accumulators (resident across the
    reduction axes).  Per-tile work is pure VPU vreg adds; the single 128->1
    cross-lane reduce happens later in the tiny JAX epilogue.
    """
    n = pl.program_id(2)
    h = pl.program_id(3)

    @pl.when(jnp.logical_and(n == 0, h == 0))
    def _init():
        psum_ref[...] = jnp.zeros_like(psum_ref)
        pssq_ref[...] = jnp.zeros_like(pssq_ref)

    _, tc, thw = x_ref.shape
    # Shifted by the running mean to keep E[x^2]-E[x]^2 well conditioned once
    # running stats have converged (shift is exactly compensated in the epilogue).
    xs = x_ref[0].astype(jnp.float32) - rm_ref[...]            # (TC, THW)

    lane_blocks = thw // 128
    full = lane_blocks * 128
    s = jnp.zeros((tc, 128), jnp.float32)
    q = jnp.zeros((tc, 128), jnp.float32)
    for j in range(lane_blocks):                               # static unroll: VPU adds
        blk = xs[:, j * 128:(j + 1) * 128]
        s = s + blk
        q = q + blk * blk
    if full < thw:                                             # lane tail (THW % 128 != 0)
        tail = xs[:, full:]
        ts = jnp.sum(tail, axis=1, keepdims=True)
        tq = jnp.sum(tail * tail, axis=1, keepdims=True)
        lane = lax.broadcasted_iota(jnp.int32, (tc, 128), 1)
        s = s + jnp.where(lane == 0, ts, 0.0)
        q = q + jnp.where(lane == 0, tq, 0.0)

    psum_ref[0] += s
    pssq_ref[0] += q


def _bn_apply_kernel(x_ref, scale_ref, shift_ref, y_ref):
    """Streaming pass 2: y = x * scale[c] + shift[c] on a (1, TC, THW) tile."""
    # TODO(synk): bf16 inputs on v6e/v7x could run this in bf16 (halves vreg
    # footprint); kept in f32 which is correct on every generation.
    x = x_ref[0].astype(jnp.float32)
    y_ref[0] = (x * scale_ref[...] + shift_ref[...]).astype(y_ref.dtype)


def batchnorm_layer_forward(x_nchw, gamma, beta, running_mean, running_var,
                            momentum=0.1, eps=1e-5, force_two_pass=False):
    """Training-mode forward of BatchNormLayer (affine, track_running_stats).

    Args:
      x_nchw: (N, C, H, W) input (PyTorch NCHW convention).
      gamma, beta, running_mean, running_var: (C,) parameters / buffers.
      force_two_pass: testing hook that disables the fused fast path.

    Returns:
      y_nchw: (N, C, H, W) normalized output (same dtype as input).
      new_running_mean, new_running_var: (C,) updated running statistics (f32).
    """
    N, C, H, W = x_nchw.shape
    HW = H * W
    M = N * HW
    f32 = jnp.float32
    momentum = float(momentum)
    eps = float(eps)

    x3 = x_nchw.reshape(N, C, HW)                 # native-layout view, no transpose
    gamma_f = gamma.astype(f32)
    beta_f = beta.astype(f32)
    rm_f = running_mean.astype(f32)
    rv_f = running_var.astype(f32)
    gamma2, beta2 = gamma_f.reshape(C, 1), beta_f.reshape(C, 1)
    rm2, rv2 = rm_f.reshape(C, 1), rv_f.reshape(C, 1)

    unit = _sublane_unit(x_nchw.dtype)
    vmem_limit, tile_budget, thw_cap = _generation_budgets()

    # ------------------- Fused single-read fast path -------------------------
    slab_cap = vmem_limit // 8                    # f32 bytes for one resident slab
    cap_tc_fused = max(unit, ((slab_cap // 4) // max(M, 1)) // unit * unit)
    tc_f = _pick_tile(C, unit, cap_tc_fused)
    if (not force_two_pass) and tc_f * M * 4 <= slab_cap:
        gc = C // tc_f
        x_spec = pl.BlockSpec((N, tc_f, HW), lambda ci: (0, ci, 0))
        c_spec = pl.BlockSpec((tc_f, 1), lambda ci: (ci, 0))
        kernel = functools.partial(_bn_fused_kernel, momentum=momentum,
                                   eps=eps, m_total=float(M))
        y3, new_rm, new_rv = pl.pallas_call(
            kernel,
            out_shape=(jax.ShapeDtypeStruct((N, C, HW), x_nchw.dtype),
                       jax.ShapeDtypeStruct((C, 1), f32),
                       jax.ShapeDtypeStruct((C, 1), f32)),
            grid_spec=pltpu.PrefetchScalarGridSpec(
                num_scalar_prefetch=0,
                grid=(gc,),
                in_specs=[x_spec, c_spec, c_spec, c_spec, c_spec],
                out_specs=(x_spec, c_spec, c_spec)),
            compiler_params=pltpu.CompilerParams(
                dimension_semantics=("parallel",),
                vmem_limit_bytes=vmem_limit),
        )(x3, gamma2, beta2, rm2, rv2)
        return y3.reshape(N, C, H, W), new_rm.reshape(C), new_rv.reshape(C)

    # ------------------- Streaming two-pass path ------------------------------
    thw = _pick_tile(HW, 128, thw_cap)
    cap_c = max(unit, ((tile_budget // 4) // max(thw, 1)) // unit * unit)
    tc = _pick_tile(C, unit, cap_c)
    gc, ghw = C // tc, HW // thw

    # Cover the 2nd TensorCore on v7x when C yields a single channel tile by
    # splitting the N reduction into two parallel halves (harmless elsewhere).
    ns = 2 if (gc < 2 and N >= 2 and N % 2 == 0) else 1
    rn = N // ns

    x_stats_spec = pl.BlockSpec((1, tc, thw),
                                lambda s, ci, n, h: (s * rn + n, ci, h))
    rm_spec = pl.BlockSpec((tc, 1), lambda s, ci, n, h: (ci, 0))
    part_spec = pl.BlockSpec((1, tc, 128), lambda s, ci, n, h: (s, ci, 0))

    psum, pssq = pl.pallas_call(
        _bn_partial_kernel,
        out_shape=(jax.ShapeDtypeStruct((ns, C, 128), f32),) * 2,
        grid_spec=pltpu.PrefetchScalarGridSpec(
            num_scalar_prefetch=0,
            grid=(ns, gc, rn, ghw),
            in_specs=[x_stats_spec, rm_spec],
            out_specs=(part_spec, part_spec)),
        compiler_params=pltpu.CompilerParams(
            dimension_semantics=("parallel", "parallel", "arbitrary", "arbitrary"),
            vmem_limit_bytes=vmem_limit),
    )(x3, rm2)

    # Tiny (C,)-sized epilogue in plain JAX: combine partials, derive scale/shift
    # and the running-stat updates.
    inv_m = 1.0 / M
    sum_c = jnp.sum(psum, axis=(0, 2))                        # Σ (x - rm)
    ssq_c = jnp.sum(pssq, axis=(0, 2))                        # Σ (x - rm)^2
    mean_s = sum_c * inv_m
    var_b = jnp.maximum(ssq_c * inv_m - mean_s * mean_s, 0.0)  # biased batch var
    mean = mean_s + rm_f
    scale = gamma_f * lax.rsqrt(var_b + eps)
    shift = beta_f - mean * scale
    bessel = M / max(M - 1.0, 1.0)
    new_rm = (1.0 - momentum) * rm_f + momentum * mean
    new_rv = (1.0 - momentum) * rv_f + momentum * (var_b * bessel)

    x_spec = pl.BlockSpec((1, tc, thw), lambda ci, n, h: (n, ci, h))
    cvec_spec = pl.BlockSpec((tc, 1), lambda ci, n, h: (ci, 0))
    y3 = pl.pallas_call(
        _bn_apply_kernel,
        out_shape=jax.ShapeDtypeStruct((N, C, HW), x_nchw.dtype),
        grid_spec=pltpu.PrefetchScalarGridSpec(
            num_scalar_prefetch=0,
            grid=(gc, N, ghw),
            in_specs=[x_spec, cvec_spec, cvec_spec],
            out_specs=x_spec),
        compiler_params=pltpu.CompilerParams(
            dimension_semantics=("parallel", "parallel", "parallel"),
            vmem_limit_bytes=vmem_limit),
    )(x3, scale.reshape(C, 1), shift.reshape(C, 1))

    return y3.reshape(N, C, H, W), new_rm, new_rv


if __name__ == "__main__":
    key = jax.random.PRNGKey(0)
    N, C, H, W = 2, 4, 16, 16

    x = jax.random.normal(key, (N, C, H, W), dtype=jnp.float32) * 2.0 + 0.5

    # Deterministic init matching BatchNormLayer.__init__:
    #   scale = ones, bias = zeros; checkpoint_stats(): mean_0=zeros, var_0=ones
    gamma = jnp.ones((C,), dtype=jnp.float32)
    beta = jnp.zeros((C,), dtype=jnp.float32)
    running_mean = jnp.zeros((C,), dtype=jnp.float32)
    running_var = jnp.ones((C,), dtype=jnp.float32)

    # Pure-JAX reference (PyTorch F.batch_norm training-mode semantics).
    m = N * H * W
    mean_ref = jnp.mean(x, axis=(0, 2, 3))
    var_b_ref = jnp.mean((x - mean_ref[None, :, None, None]) ** 2, axis=(0, 2, 3))
    y_ref = (x - mean_ref[None, :, None, None]) / jnp.sqrt(
        var_b_ref[None, :, None, None] + 1e-5) * gamma[None, :, None, None] \
        + beta[None, :, None, None]
    rm_ref = 0.9 * running_mean + 0.1 * mean_ref
    rv_ref = 0.9 * running_var + 0.1 * var_b_ref * (m / (m - 1.0))

    # Exercise both the fused single-read path and the streaming two-pass path.
    for force_two_pass in (False, True):
        y, new_rm, new_rv = batchnorm_layer_forward(
            x, gamma, beta, running_mean, running_var,
            momentum=0.1, eps=1e-5, force_two_pass=force_two_pass)
        jax.block_until_ready((y, new_rm, new_rv))
        assert jnp.allclose(y, y_ref, atol=1e-4, rtol=1e-4)
        assert jnp.allclose(new_rm, rm_ref, atol=1e-4, rtol=1e-4)
        assert jnp.allclose(new_rv, rv_ref, atol=1e-4, rtol=1e-4)

    print("KERNEL_OK")
</pallas_src>

<mosaic_0001>
module attributes {stable_mosaic.version = 11 : i64} {
  func.func @_bn_fused_kernel(%arg0: i32, %arg1: memref<2x4x256xf32, #tpu.memory_space<vmem>>, %arg2: memref<4x1xf32, #tpu.memory_space<vmem>>, %arg3: memref<4x1xf32, #tpu.memory_space<vmem>>, %arg4: memref<4x1xf32, #tpu.memory_space<vmem>>, %arg5: memref<4x1xf32, #tpu.memory_space<vmem>>, %arg6: memref<2x4x256xf32, #tpu.memory_space<vmem>>, %arg7: memref<4x1xf32, #tpu.memory_space<vmem>>, %arg8: memref<4x1xf32, #tpu.memory_space<vmem>>) attributes {dimension_semantics = [#tpu.dimension_semantics<parallel>], iteration_bounds = array<i64: 1>, scalar_prefetch = 0 : i64, scratch_operands = 0 : i64, tpu.core_type = #tpu.core_type<tc>, window_params = [{transform_indices = @transform_0, window_bounds = array<i64: 2, 4, 256>}, {transform_indices = @transform_1, window_bounds = array<i64: 4, 1>}, {transform_indices = @transform_2, window_bounds = array<i64: 4, 1>}, {transform_indices = @transform_3, window_bounds = array<i64: 4, 1>}, {transform_indices = @transform_4, window_bounds = array<i64: 4, 1>}, {transform_indices = @transform_5, window_bounds = array<i64: 2, 4, 256>}, {transform_indices = @transform_6, window_bounds = array<i64: 4, 1>}, {transform_indices = @transform_7, window_bounds = array<i64: 4, 1>}]} {
    %c0 = arith.constant 0 : index
    %c0_0 = arith.constant 0 : index
    %c0_1 = arith.constant 0 : index
    %0 = vector.load %arg1[%c0, %c0_0, %c0_1] : memref<2x4x256xf32, #tpu.memory_space<vmem>>, vector<2x4x256xf32>
    %cst = arith.constant dense<0.000000e+00> : vector<4x256xf32>
    %1 = vector.multi_reduction <add>, %0, %cst [0] : vector<2x4x256xf32> to vector<4x256xf32>
    %cst_2 = arith.constant dense<0.000000e+00> : vector<4xf32>
    %2 = vector.multi_reduction <add>, %1, %cst_2 [1] : vector<4x256xf32> to vector<4xf32>
    %3 = vector.shape_cast %2 : vector<4xf32> to vector<4x1xf32>
    %cst_3 = arith.constant 0.001953125 : f32
    %4 = vector.broadcast %cst_3 : f32 to vector<4x1xf32>
    %5 = arith.mulf %3, %4 : vector<4x1xf32>
    %6 = vector.shape_cast %5 : vector<4x1xf32> to vector<1x4x1xf32>
    %7 = vector.broadcast %6 : vector<1x4x1xf32> to vector<2x4x256xf32>
    %8 = arith.subf %0, %7 : vector<2x4x256xf32>
    %9 = arith.mulf %8, %8 : vector<2x4x256xf32>
    %cst_4 = arith.constant dense<0.000000e+00> : vector<4x256xf32>
    %10 = vector.multi_reduction <add>, %9, %cst_4 [0] : vector<2x4x256xf32> to vector<4x256xf32>
    %cst_5 = arith.constant dense<0.000000e+00> : vector<4xf32>
    %11 = vector.multi_reduction <add>, %10, %cst_5 [1] : vector<4x256xf32> to vector<4xf32>
    %12 = vector.shape_cast %11 : vector<4xf32> to vector<4x1xf32>
    %cst_6 = arith.constant 0.001953125 : f32
    %13 = vector.broadcast %cst_6 : f32 to vector<4x1xf32>
    %14 = arith.mulf %12, %13 : vector<4x1xf32>
    %c0_7 = arith.constant 0 : index
    %c0_8 = arith.constant 0 : index
    %15 = vector.load %arg2[%c0_7, %c0_8] : memref<4x1xf32, #tpu.memory_space<vmem>>, vector<4x1xf32>
    %cst_9 = arith.constant 9.99999974E-6 : f32
    %16 = vector.broadcast %cst_9 : f32 to vector<4x1xf32>
    %17 = arith.addf %14, %16 : vector<4x1xf32>
    %18 = math.rsqrt %17 : vector<4x1xf32>
    %19 = arith.mulf %15, %18 : vector<4x1xf32>
    %20 = vector.shape_cast %19 : vector<4x1xf32> to vector<1x4x1xf32>
    %21 = vector.broadcast %20 : vector<1x4x1xf32> to vector<2x4x256xf32>
    %22 = arith.mulf %8, %21 : vector<2x4x256xf32>
    %c0_10 = arith.constant 0 : index
    %c0_11 = arith.constant 0 : index
    %23 = vector.load %arg3[%c0_10, %c0_11] : memref<4x1xf32, #tpu.memory_space<vmem>>, vector<4x1xf32>
    %24 = vector.shape_cast %23 : vector<4x1xf32> to vector<1x4x1xf32>
    %25 = vector.broadcast %24 : vector<1x4x1xf32> to vector<2x4x256xf32>
    %26 = arith.addf %22, %25 : vector<2x4x256xf32>
    %c0_12 = arith.constant 0 : index
    %c0_13 = arith.constant 0 : index
    %c0_14 = arith.constant 0 : index
    %27 = vector.load %arg6[%c0_12, %c0_13, %c0_14] : memref<2x4x256xf32, #tpu.memory_space<vmem>>, vector<2x4x256xf32>
    tpu.vector_store %arg6[%c0_12, %c0_13, %c0_14], %26 {strides = array<i32>} : memref<2x4x256xf32, #tpu.memory_space<vmem>>, vector<2x4x256xf32>,
    %c0_15 = arith.constant 0 : index
    %c0_16 = arith.constant 0 : index
    %28 = vector.load %arg4[%c0_15, %c0_16] : memref<4x1xf32, #tpu.memory_space<vmem>>, vector<4x1xf32>
    %cst_17 = arith.constant 0.899999976 : f32
    %29 = vector.broadcast %cst_17 : f32 to vector<4x1xf32>
    %30 = arith.mulf %29, %28 : vector<4x1xf32>
    %cst_18 = arith.constant 1.000000e-01 : f32
    %31 = vector.broadcast %cst_18 : f32 to vector<4x1xf32>
    %32 = arith.mulf %31, %5 : vector<4x1xf32>
    %33 = arith.addf %30, %32 : vector<4x1xf32>
    %c0_19 = arith.constant 0 : index
    %c0_20 = arith.constant 0 : index
    %34 = vector.load %arg7[%c0_19, %c0_20] : memref<4x1xf32, #tpu.memory_space<vmem>>, vector<4x1xf32>
    tpu.vector_store %arg7[%c0_19, %c0_20], %33 {strides = array<i32>} : memref<4x1xf32, #tpu.memory_space<vmem>>, vector<4x1xf32>,
    %c0_21 = arith.constant 0 : index
    %c0_22 = arith.constant 0 : index
    %35 = vector.load %arg5[%c0_21, %c0_22] : memref<4x1xf32, #tpu.memory_space<vmem>>, vector<4x1xf32>
    %cst_23 = arith.constant 0.899999976 : f32
    %36 = vector.broadcast %cst_23 : f32 to vector<4x1xf32>
    %37 = arith.mulf %36, %35 : vector<4x1xf32>
    %cst_24 = arith.constant 1.00195694 : f32
    %38 = vector.broadcast %cst_24 : f32 to vector<4x1xf32>
    %39 = arith.mulf %14, %38 : vector<4x1xf32>
    %cst_25 = arith.constant 1.000000e-01 : f32
    %40 = vector.broadcast %cst_25 : f32 to vector<4x1xf32>
    %41 = arith.mulf %40, %39 : vector<4x1xf32>
    %42 = arith.addf %37, %41 : vector<4x1xf32>
    %c0_26 = arith.constant 0 : index
    %c0_27 = arith.constant 0 : index
    %43 = vector.load %arg8[%c0_26, %c0_27] : memref<4x1xf32, #tpu.memory_space<vmem>>, vector<4x1xf32>
    tpu.vector_store %arg8[%c0_26, %c0_27], %42 {strides = array<i32>} : memref<4x1xf32, #tpu.memory_space<vmem>>, vector<4x1xf32>,
    return
  }
  func.func @transform_0(%arg0: i32) -> (i32, i32, i32) {
    %c0_i32 = arith.constant 0 : i32
    %c0_i32_0 = arith.constant 0 : i32
    %c0_i32_1 = arith.constant 0 : i32
    return %c0_i32, %arg0, %c0_i32_0 : i32, i32, i32
  }
  func.func @transform_1(%arg0: i32) -> (i32, i32) {
    %c0_i32 = arith.constant 0 : i32
    %c0_i32_0 = arith.constant 0 : i32
    return %arg0, %c0_i32 : i32, i32
  }
  func.func @transform_2(%arg0: i32) -> (i32, i32) {
    %c0_i32 = arith.constant 0 : i32
    %c0_i32_0 = arith.constant 0 : i32
    return %arg0, %c0_i32 : i32, i32
  }
  func.func @transform_3(%arg0: i32) -> (i32, i32) {
    %c0_i32 = arith.constant 0 : i32
    %c0_i32_0 = arith.constant 0 : i32
    return %arg0, %c0_i32 : i32, i32
  }
  func.func @transform_4(%arg0: i32) -> (i32, i32) {
    %c0_i32 = arith.constant 0 : i32
    %c0_i32_0 = arith.constant 0 : i32
    return %arg0, %c0_i32 : i32, i32
  }
  func.func @transform_5(%arg0: i32) -> (i32, i32, i32) {
    %c0_i32 = arith.constant 0 : i32
    %c0_i32_0 = arith.constant 0 : i32
    %c0_i32_1 = arith.constant 0 : i32
    return %c0_i32, %arg0, %c0_i32_0 : i32, i32, i32
  }
  func.func @transform_6(%arg0: i32) -> (i32, i32) {
    %c0_i32 = arith.constant 0 : i32
    %c0_i32_0 = arith.constant 0 : i32
    return %arg0, %c0_i32 : i32, i32
  }
  func.func @transform_7(%arg0: i32) -> (i32, i32) {
    %c0_i32 = arith.constant 0 : i32
    %c0_i32_0 = arith.constant 0 : i32
    return %arg0, %c0_i32 : i32, i32
  }
}

</mosaic_0001>

<llo_original>
// kernel: tpu_custom_call.1
$region0: #{tpu_custom_call.1}
  #allocation0 [shape = 'u32[]', space=smem, size = 0x4, offset = 0x4, fixed_abs, tag = 'smem constant byte address 0x4 - core index']
  #allocation1 [shape = 'u32[144,128]{1,0:T(1,128)}', space=vmem, size = 0x12000, scoped, tag = 'internal scratch']
  %s0 = inlined_call_operand.vmem [shape: f32[2,4,256], index: 0, kind: input, shape index: {}]
  %s1 = inlined_call_operand.vmem [shape: f32[4,1], index: 1, kind: input, shape index: {}]
  %s2 = inlined_call_operand.vmem [shape: f32[4,1], index: 2, kind: input, shape index: {}]
  %s3 = inlined_call_operand.vmem [shape: f32[4,1], index: 3, kind: input, shape index: {}]
  %s4 = inlined_call_operand.vmem [shape: f32[4,1], index: 4, kind: input, shape index: {}]
  %s5 = inlined_call_operand.hbm [shape: f32[2,4,256], index: 5, kind: output, shape index: {0}]
  %s6 = inlined_call_operand.vmem [shape: f32[4,1], index: 6, kind: output, shape index: {1}]
  %s7 = inlined_call_operand.vmem [shape: f32[4,1], index: 7, kind: output, shape index: {2}]
  %8 = xla_tuple %s5, %s6, %s7
  %s9 = sld [smem:[#allocation0]]
  $region46: #{tpu_custom_call.1} parent=0
    _
  %s11 = ssub.s32 1, %s9
  %s12 = scalar_select 0, %s11, %s9
  $region1: #{tpu_custom_call.1} parent=0
    #allocation2 [shape = 'u8[8192]{0}', space=vmem, size = 0x2000, scoped, tag = 'output window, operand 0, single buffered']
    #allocation3 [shape = 's32[1]{0}', space=sflag, size = 0x4, scoped, tag = 'scoped memory for tpu_custom_call.1']
    %13 = vsyncpa [#allocation3], 0
    // Predicated region
    $region2: #{tpu_custom_call.1} parent=1 // pred_check
      _
    $region3: #{tpu_custom_call.1} parent=1 // pred_check_branch
      %15 = sbr.rel (0) target = $region5
    $region4: #{tpu_custom_call.1} parent=1 // pred_region
      _
    $region5: #{tpu_custom_call.1} parent=1 // pred_fallthru
      _
    // Predicated region
    $region6: #{tpu_custom_call.1} parent=1 // pred_check
      _
    $region7: #{tpu_custom_call.1} parent=1 // pred_check_branch
      %17 = sbr.rel (0) target = $region9
    $region8: #{tpu_custom_call.1} parent=1 // pred_region
      _
    $region9: #{tpu_custom_call.1} parent=1 // pred_fallthru
      _
    // Predicated region
    $region10: #{tpu_custom_call.1} parent=1 // pred_check
      _
    $region11: #{tpu_custom_call.1} parent=1 // pred_check_branch
      %19 = sbr.rel (0) target = $region13
    $region12: #{tpu_custom_call.1} parent=1 // pred_region
      _
    $region13: #{tpu_custom_call.1} parent=1 // pred_fallthru
      _
    // Predicated region
    $region14: #{tpu_custom_call.1} parent=1 // pred_check
      _
    $region15: #{tpu_custom_call.1} parent=1 // pred_check_branch
      %21 = sbr.rel (0) target = $region17
    $region16: #{tpu_custom_call.1} parent=1 // pred_region
      _
    $region17: #{tpu_custom_call.1} parent=1 // pred_fallthru
      _
    // Predicated region
    $region18: #{tpu_custom_call.1} parent=1 // pred_check
      _
    $region19: #{tpu_custom_call.1} parent=1 // pred_check_branch
      %23 = sbr.rel (0) target = $region21
    $region20: #{tpu_custom_call.1} parent=1 // pred_region
      _
    $region21: #{tpu_custom_call.1} parent=1 // pred_fallthru
      _
    %v24 = vld [vmem:[%s0] sm:$0xff]
    %v25 = vld [vmem:[%s0 + $0x8] sm:$0xff]
    %v28 = vcombine.high %v24, %v24
    %v29 = vcombine.high %v25, %v25
    %vm32 = vcmask 1043456
    %v33 = vsel %vm32, %v24, 0.0
    %v34 = vsel %vm32, %v25, 0.0
    %v35 = vadd.f32 %v33, %v34
    %v36 = vsel %vm32, %v28, 0.0
    %v37 = vsel %vm32, %v29, 0.0
    %v38 = vadd.f32 %v36, %v37
    %v39 = vsel %vm32, %v35, 0.0
    %v40 = vsel %vm32, %v38, 0.0
    %v41 = vadd.f32 %v39, %v40
    %42 = vadd.xlane.f32.xlu0 %v41
    %v43 = vpop.xlane.xlu0 %42
    %v44 = vmul.f32 %v43, 0.001953125
    %v47 = vunpack.c.l.s4 839922192
    %v48 = vunpack.c.0.s8 %v47
    %v49 = vlaneseq
    %v50 = vshrl.u32 %v49, 7
    %v51 = vsub.s32 %v48, %v50
    %v52 = vrot.slane %v44, %v51
    %v54 = vsub.f32 %v24, %v52
    %v55 = vsub.f32 %v25, %v52
    %v56 = vmul.f32 %v54, %v54
    %v57 = vmul.f32 %v55, %v55
    %v60 = vcombine.high %v56, %v56
    %v61 = vcombine.high %v57, %v57
    %v64 = vsel %vm32, %v56, 0.0
    %v65 = vsel %vm32, %v57, 0.0
    %v66 = vadd.f32 %v64, %v65
    %v67 = vsel %vm32, %v60, 0.0
    %v68 = vsel %vm32, %v61, 0.0
    %v69 = vadd.f32 %v67, %v68
    %v70 = vsel %vm32, %v66, 0.0
    %v71 = vsel %vm32, %v69, 0.0
    %v72 = vadd.f32 %v70, %v71
    %73 = vadd.xlane.f32.xlu0 %v72
    %v74 = vpop.xlane.xlu0 %73
    %v75 = vmul.f32 %v74, 0.001953125
    %v76 = vld [vmem:[%s1] sm:$0xf]
    %v77 = vadd.f32 %v75, 1e-05
    %v78 = vrsqrt.pop %v77
    %v79 = vmul.f32 %v76, %v78
    %81 = vset.pattern.permute.xlu0 0
    %82 = vperm.xlu0 %81, %v79
    %v83 = vpop.permute.xlu0 %82
    %v85 = vunpack.c.l.s4 839922192
    %v86 = vunpack.c.0.s8 %v85
    %v87 = vlaneseq
    %v88 = vshrl.u32 %v87, 7
    %v89 = vsub.s32 %v86, %v88
    %v90 = vrot.slane %v83, %v89
    %v92 = vmul.f32 %v54, %v90
    %v93 = vmul.f32 %v55, %v90
    %v94 = vld [vmem:[%s2] sm:$0xf]
    %96 = vset.pattern.permute.xlu0 0
    %97 = vperm.xlu0 %96, %v94
    %v98 = vpop.permute.xlu0 %97
    %v100 = vunpack.c.l.s4 839922192
    %v101 = vunpack.c.0.s8 %v100
    %v102 = vlaneseq
    %v103 = vshrl.u32 %v102, 7
    %v104 = vsub.s32 %v101, %v103
    %v105 = vrot.slane %v98, %v104
    %v107 = vadd.f32 %v92, %v105
    %v108 = vadd.f32 %v93, %v105
    %109 = vst [vmem:[#allocation2] sm:$0xff] %v107
    %110 = vst [vmem:[#allocation2 + $0x8] sm:$0xff] %v108
    %v111 = vld [vmem:[%s3] sm:$0xf]
    %v112 = vmul.f32 %v111, 0.9
    %v113 = vmul.f32 %v44, 0.1
    %v114 = vadd.f32 %v112, %v113
    %vm115 = vcmask 3072
    %116 = vst.msk [vmem:[%s6] sm:$0xf] %vm115, %v114
    %v117 = vld [vmem:[%s4] sm:$0xf]
    %v118 = vmul.f32 %v117, 0.9
    %v119 = vmul.f32 %v75, 1.0019569
    %v120 = vmul.f32 %v119, 0.1
    %v121 = vadd.f32 %v118, %v120
    %122 = vst.msk [vmem:[%s7] sm:$0xf] %vm115, %v121
    // Predicated region
    $region22: #{tpu_custom_call.1} parent=1 // pred_check
      _
    $region23: #{tpu_custom_call.1} parent=1 // pred_check_branch
      %124 = sbr.rel (0) target = $region25
    $region24: #{tpu_custom_call.1} parent=1 // pred_region
      %s126 = ssub.s32 256, 256
      %127 = vsyncadd [#allocation3], %s126
      %s128 = sshll.u32 [#allocation2], 4
      %s129 = int_to_ptr.vmem [resolvable:$true] %s128
      %134 = dma.vmem_to_hbm [thread:$0]  %s129, 256, %s5, [#allocation3], 128, 128, 8
    $region25: #{tpu_custom_call.1} parent=1 // pred_fallthru
      _
    // Predicated region
    $region26: #{tpu_custom_call.1} parent=1 // pred_check
      _
    $region27: #{tpu_custom_call.1} parent=1 // pred_check_branch
      %136 = sbr.rel (0) target = $region29
    $region28: #{tpu_custom_call.1} parent=1 // pred_region
      _
    $region29: #{tpu_custom_call.1} parent=1 // pred_fallthru
      _
    // Predicated region
    $region30: #{tpu_custom_call.1} parent=1 // pred_check
      _
    $region31: #{tpu_custom_call.1} parent=1 // pred_check_branch
      %138 = sbr.rel (0) target = $region33
    $region32: #{tpu_custom_call.1} parent=1 // pred_region
      _
    $region33: #{tpu_custom_call.1} parent=1 // pred_fallthru
      _
    // Predicated region
    $region34: #{tpu_custom_call.1} parent=1 // pred_check
      _
    $region35: #{tpu_custom_call.1} parent=1 // pred_check_branch
      %140 = sbr.rel (0) target = $region37
    $region36: #{tpu_custom_call.1} parent=1 // pred_region
      %141 = dma.done [#allocation3], 256
    $region37: #{tpu_custom_call.1} parent=1 // pred_fallthru
      _
    // Predicated region
    $region38: #{tpu_custom_call.1} parent=1 // pred_check
      _
    $region39: #{tpu_custom_call.1} parent=1 // pred_check_branch
      %143 = sbr.rel (0) target = $region41
    $region40: #{tpu_custom_call.1} parent=1 // pred_region
      _
    $region41: #{tpu_custom_call.1} parent=1 // pred_fallthru
      _
    // Predicated region
    $region42: #{tpu_custom_call.1} parent=1 // pred_check
      _
    $region43: #{tpu_custom_call.1} parent=1 // pred_check_branch
      %145 = sbr.rel (0) target = $region45
    $region44: #{tpu_custom_call.1} parent=1 // pred_region
      _
    $region45: #{tpu_custom_call.1} parent=1 // pred_fallthru
      _
    %146 = vsyncpa [#allocation3], 1

</llo_original>
